<compile_context>
chip_gen: v7x
topology: tpu7x:2x2x1
jax: 0.10.0
libtpu: 0.0.40
codegen_flags: <defaults>
</compile_context>

<pallas_src>
import numpy as np
import jax
import jax.numpy as jnp
from jax import lax
from jax.experimental import pallas as pl
from jax.experimental.pallas import tpu as pltpu

_EPS = 1e-5          # nn.InstanceNorm2d default eps
_LANE = 128          # TPU lane width: channel dims are padded to a multiple of this
_ALIGN = 8           # sublane alignment for the halo scratch interior


def _round_up(x, m):
    return ((x + m - 1) // m) * m


def _elu(x):
    # F.elu, alpha=1.  (expm1 would be marginally more accurate near 0; exp is
    # the guaranteed-lowered EUP path, so keep exp(x) - 1.)
    return jnp.where(x > 0, x, jnp.exp(x) - 1.0)


def _instance_norm(x, gamma, beta):
    # x: (H*W, C) f32; per-channel mean/var over the spatial axis (biased var,
    # matching PyTorch InstanceNorm normalization), then affine (affine=True).
    mean = jnp.mean(x, axis=0, keepdims=True)
    var = jnp.mean(jnp.square(x - mean), axis=0, keepdims=True)
    return (x - mean) * lax.rsqrt(var + _EPS) * gamma + beta


# ---------------------------------------------------------------------------
# Fused ConvLayer kernel
# ---------------------------------------------------------------------------
def _make_conv_kernel(K, pad, H, W, Cp, Cop, do_pre, do_post, has_res):
    """Builds the fused kernel: pre-norm/ELU -> im2col conv -> bias -> post-norm/ELU
    -> residual.  One batch element per grid step."""
    HW = H * W

    def kernel(*refs):
        i = 0
        x_ref = refs[i]; i += 1                     # (1, H, W, Cp)  f32
        r_ref = None
        if has_res:
            r_ref = refs[i]; i += 1                 # (1, H, W, Cop) f32
        w_ref = refs[i]; i += 1                     # (K*K*Cp, Cop)  f32 (im2col layout)
        b_ref = refs[i]; i += 1                     # (1, Cop)
        g_ref = bt_ref = None
        if do_pre or do_post:
            g_ref = refs[i]; i += 1                 # (1, Cn)
            bt_ref = refs[i]; i += 1                # (1, Cn)
        o_ref = refs[i]; i += 1                     # (1, H, W, Cop)
        if K > 1:
            xp_ref = refs[i]; i += 1                # halo scratch, f32
            col_ref = refs[i]; i += 1               # (HW, K*K*Cp) bf16 im2col scratch

        xf = x_ref[0].reshape(HW, Cp).astype(jnp.float32)
        if do_pre:                                   # pre_activate: elu(instance_norm(x))
            xf = _elu(_instance_norm(xf, g_ref[...], bt_ref[...]))

        if K > 1:
            # Zero-padded halo + im2col assembled in VMEM -> one big MXU matmul.
            xp_ref[...] = jnp.zeros_like(xp_ref)
            xp_ref[_ALIGN:_ALIGN + H, _ALIGN:_ALIGN + W, :] = xf.reshape(H, W, Cp)
            for kh in range(K):
                for kw in range(K):
                    kk = kh * K + kw
                    r0 = _ALIGN - pad + kh
                    c0 = _ALIGN - pad + kw
                    tap = xp_ref[r0:r0 + H, c0:c0 + W, :]          # (H, W, Cp)
                    col_ref[:, kk * Cp:(kk + 1) * Cp] = (
                        tap.reshape(HW, Cp).astype(jnp.bfloat16))  # lane-aligned write
            patches = col_ref[...]                                  # (HW, K*K*Cp) bf16
        else:
            patches = xf.astype(jnp.bfloat16)                       # (HW, Cp) bf16

        # Single MXU matmul, bf16 inputs, f32 accumulate.
        acc = jnp.dot(patches, w_ref[...].astype(jnp.bfloat16),
                      preferred_element_type=jnp.float32)           # (HW, Cop)
        acc = acc + b_ref[...]

        if do_post:                                  # post: elu(instance_norm(conv(x)+b))
            acc = _elu(_instance_norm(acc, g_ref[...], bt_ref[...]))
        if has_res:                                  # fused residual add (ResLayer)
            acc = acc + r_ref[0].reshape(HW, Cop).astype(jnp.float32)

        o_ref[...] = acc.reshape(1, H, W, Cop).astype(o_ref.dtype)

    return kernel


def _conv_layer_pallas(x, p, *, do_pre, do_post, res=None):
    B, H, W, Cp = x.shape
    K = p["k"]
    pad = K // 2
    w_col = p["w_col"]
    KKC, Cop = w_col.shape
    assert KKC == K * K * Cp and Cp == p["cin_p"] and Cop == p["cout_p"]

    kernel = _make_conv_kernel(K, pad, H, W, Cp, Cop, do_pre, do_post, res is not None)

    in_specs = [pl.BlockSpec((1, H, W, Cp), lambda b: (b, 0, 0, 0))]
    inputs = [x]
    if res is not None:
        in_specs.append(pl.BlockSpec((1, H, W, Cop), lambda b: (b, 0, 0, 0)))
        inputs.append(res)
    in_specs += [pl.BlockSpec((KKC, Cop), lambda b: (0, 0)),
                 pl.BlockSpec((1, Cop), lambda b: (0, 0))]
    inputs += [w_col, p["b"]]
    if do_pre or do_post:
        Cn = Cp if do_pre else Cop
        assert p["gamma"].shape == (1, Cn) and p["beta"].shape == (1, Cn)
        in_specs += [pl.BlockSpec((1, Cn), lambda b: (0, 0)),
                     pl.BlockSpec((1, Cn), lambda b: (0, 0))]
        inputs += [p["gamma"], p["beta"]]
    # gamma/beta are NOT passed (and not DMA'd) when no norm is applied.

    scratch_shapes = []
    if K > 1:
        scratch_shapes = [
            pltpu.VMEM((H + 2 * _ALIGN, W + 2 * _ALIGN, Cp), jnp.float32),  # halo
            pltpu.VMEM((H * W, K * K * Cp), jnp.bfloat16),                  # im2col
        ]

    return pl.pallas_call(
        kernel,
        out_shape=jax.ShapeDtypeStruct((B, H, W, Cop), jnp.float32),
        grid=(B,),
        in_specs=in_specs,
        out_specs=pl.BlockSpec((1, H, W, Cop), lambda b: (b, 0, 0, 0)),
        scratch_shapes=scratch_shapes,
        compiler_params=pltpu.CompilerParams(
            dimension_semantics=("parallel",),
            # ~3 MiB actually used at these shapes; explicit limit is safe on
            # v5e (16 MiB default), v6e (32 MiB default) and v7x (64 MiB phys).
            vmem_limit_bytes=32 * 1024 * 1024),
    )(*inputs)


# ---------------------------------------------------------------------------
# Final spatial mean  ==  y.view(B, C, -1).mean(dim=2)
# ---------------------------------------------------------------------------
def _mean_kernel(x_ref, o_ref):
    H, W, Cp = x_ref.shape[1], x_ref.shape[2], x_ref.shape[3]
    x = x_ref[0].reshape(H * W, Cp).astype(jnp.float32)
    o_ref[...] = jnp.mean(x, axis=0, keepdims=True).astype(o_ref.dtype)


def _spatial_mean_pallas(x):
    B, H, W, Cp = x.shape
    return pl.pallas_call(
        _mean_kernel,
        out_shape=jax.ShapeDtypeStruct((B, Cp), jnp.float32),
        grid=(B,),
        in_specs=[pl.BlockSpec((1, H, W, Cp), lambda b: (b, 0, 0, 0))],
        out_specs=pl.BlockSpec((1, Cp), lambda b: (b, 0)),
        compiler_params=pltpu.CompilerParams(dimension_semantics=("parallel",)),
    )(x)


# ---------------------------------------------------------------------------
# Parameters (deterministic in-script init, mirrors ConvLayer.__init__)
# ---------------------------------------------------------------------------
def make_conv_params(key, in_c, out_c, kernel_size, stride=1):
    he_std = np.sqrt(2.0 / (in_c * kernel_size ** 2))
    cin_p = _round_up(in_c, _LANE)
    cout_p = _round_up(out_c, _LANE)
    # PyTorch weight (out_c, in_c, kh, kw) ~ N(0,1); wscale (he_std) folded in.
    w = jax.random.normal(key, (out_c, in_c, kernel_size, kernel_size), jnp.float32)
    w = w * jnp.float32(he_std)
    w = jnp.transpose(w, (2, 3, 1, 0))                           # (kh, kw, cin, cout)
    w = jnp.pad(w, ((0, 0), (0, 0), (0, cin_p - in_c), (0, cout_p - out_c)))
    w_col = w.reshape(kernel_size * kernel_size * cin_p, cout_p)  # im2col layout
    b = jnp.zeros((1, cout_p), jnp.float32)                       # conv bias init 0
    gamma = jnp.pad(jnp.ones((1, out_c), jnp.float32),            # InstanceNorm affine
                    ((0, 0), (0, cout_p - out_c)), constant_values=1.0)
    beta = jnp.zeros((1, cout_p), jnp.float32)
    return dict(w_col=w_col, b=b, gamma=gamma, beta=beta, k=kernel_size,
                stride=stride, cin=in_c, cout=out_c, cin_p=cin_p, cout_p=cout_p)


def init_encoder_params(key, in_channels, num_levels, num_layers, num_channels,
                        kernel_sizes):
    if len(num_layers) != num_levels or len(num_channels) != num_levels \
            or len(kernel_sizes) != num_levels:
        raise AttributeError("list lengths do not match the number of levels")
    keys = iter(jax.random.split(key, 256))
    params = {
        "init_conv": make_conv_params(next(keys), in_channels, num_channels[0], 1),
        "resblocks": [],
        "downsize": [],
        "last_channels": num_channels[-1],
    }
    for i in range(num_levels):
        block = []
        for _ in range(num_layers[i]):
            block.append({
                "conv1": make_conv_params(next(keys), num_channels[i],
                                          num_channels[i], kernel_sizes[i]),
                "conv2": make_conv_params(next(keys), num_channels[i],
                                          num_channels[i], kernel_sizes[i]),
            })
        params["resblocks"].append(block)
        if i < num_levels - 1:
            params["downsize"].append(
                make_conv_params(next(keys), num_channels[i], num_channels[i + 1],
                                 1, stride=2))
    return params


# ---------------------------------------------------------------------------
# Forward (mirrors ResNetEncoder.forward)
# ---------------------------------------------------------------------------
def resnet_encoder_forward(x_nchw, params, num_levels):
    # Boundary glue: NCHW -> NHWC + one-time channel pad to the lane width.
    y = jnp.transpose(x_nchw, (0, 2, 3, 1)).astype(jnp.float32)
    cin = y.shape[-1]
    y = jnp.pad(y, ((0, 0), (0, 0), (0, 0), (0, _round_up(cin, _LANE) - cin)))

    # init_conv: ConvLayer(pre_activate=False) -> elu(instance_norm(conv(x)+b))
    y = _conv_layer_pallas(y, params["init_conv"], do_pre=False, do_post=True)

    for i in range(num_levels):
        for layer in params["resblocks"][i]:
            # ResLayer: two pre-activate convs + residual, residual fused in-kernel.
            y1 = _conv_layer_pallas(y, layer["conv1"], do_pre=True, do_post=False)
            y = _conv_layer_pallas(y1, layer["conv2"], do_pre=True, do_post=False,
                                   res=y)
        if i < num_levels - 1:
            # 1x1 conv, stride 2, padding 0 == 1x1 conv on the subsampled grid.
            p = params["downsize"][i]
            y = _conv_layer_pallas(y[:, ::2, ::2, :], p, do_pre=False, do_post=True)

    pooled = _spatial_mean_pallas(y)                 # (B, Cpad_last), lane-dense
    return pooled[:, :params["last_channels"]]       # strip channel padding once


# ---------------------------------------------------------------------------
if __name__ == "__main__":
    key = jax.random.PRNGKey(0)
    pkey, xkey = jax.random.split(key)

    in_channels = 4
    num_levels = 2
    num_layers = [1, 1]
    num_channels = [8, 16]
    kernel_sizes = [3, 3]

    params = init_encoder_params(pkey, in_channels, num_levels, num_layers,
                                 num_channels, kernel_sizes)
    x = jax.random.normal(xkey, (2, in_channels, 16, 16), jnp.float32)  # NCHW

    out = resnet_encoder_forward(x, params, num_levels)
    out = jax.block_until_ready(out)
    assert out.shape == (2, num_channels[-1]), out.shape
    assert bool(jnp.all(jnp.isfinite(out)))
    print("KERNEL_OK")
</pallas_src>

<mosaic_0001>
module attributes {stable_mosaic.version = 11 : i64} {
  func.func @kernel(%arg0: i32, %arg1: memref<1x16x16x128xf32, #tpu.memory_space<vmem>>, %arg2: memref<128x128xf32, #tpu.memory_space<vmem>>, %arg3: memref<1x128xf32, #tpu.memory_space<vmem>>, %arg4: memref<1x128xf32, #tpu.memory_space<vmem>>, %arg5: memref<1x128xf32, #tpu.memory_space<vmem>>, %arg6: memref<1x16x16x128xf32, #tpu.memory_space<vmem>>) attributes {dimension_semantics = [#tpu.dimension_semantics<parallel>], iteration_bounds = array<i64: 2>, scalar_prefetch = 0 : i64, scratch_operands = 0 : i64, tpu.core_type = #tpu.core_type<tc>, window_params = [{transform_indices = @transform_0, window_bounds = array<i64: 1, 16, 16, 128>}, {pipeline_mode = #tpu.pipeline_mode<synchronous>, transform_indices = @transform_1, window_bounds = array<i64: 128, 128>}, {pipeline_mode = #tpu.pipeline_mode<synchronous>, transform_indices = @transform_2, window_bounds = array<i64: 1, 128>}, {pipeline_mode = #tpu.pipeline_mode<synchronous>, transform_indices = @transform_3, window_bounds = array<i64: 1, 128>}, {pipeline_mode = #tpu.pipeline_mode<synchronous>, transform_indices = @transform_4, window_bounds = array<i64: 1, 128>}, {transform_indices = @transform_5, window_bounds = array<i64: 1, 16, 16, 128>}]} {
    %c0 = arith.constant 0 : index
    %c0_0 = arith.constant 0 : index
    %c0_1 = arith.constant 0 : index
    %c0_2 = arith.constant 0 : index
    %0 = vector.load %arg1[%c0, %c0_0, %c0_1, %c0_2] : memref<1x16x16x128xf32, #tpu.memory_space<vmem>>, vector<1x16x16x128xf32>
    %1 = vector.shape_cast %0 : vector<1x16x16x128xf32> to vector<16x16x128xf32>
    %2 = vector.shape_cast %1 : vector<16x16x128xf32> to vector<256x128xf32>
    %3 = arith.truncf %2 : vector<256x128xf32> to vector<256x128xbf16>
    %c0_3 = arith.constant 0 : index
    %c0_4 = arith.constant 0 : index
    %4 = vector.load %arg2[%c0_3, %c0_4] : memref<128x128xf32, #tpu.memory_space<vmem>>, vector<128x128xf32>
    %5 = arith.truncf %4 : vector<128x128xf32> to vector<128x128xbf16>
    %cst = arith.constant dense<0.000000e+00> : vector<256x128xf32>
    %6 = tpu.matmul %3, %5, %cst {dimension_numbers = #tpu.dot_dimension_numbers<[1], [0], [0], [1], [0, 0, 1, 1], [], []>} : vector<256x128xbf16>, vector<128x128xbf16>, vector<256x128xf32> -> vector<256x128xf32>
    %c0_5 = arith.constant 0 : index
    %c0_6 = arith.constant 0 : index
    %7 = vector.load %arg3[%c0_5, %c0_6] : memref<1x128xf32, #tpu.memory_space<vmem>>, vector<1x128xf32>
    %8 = vector.broadcast %7 : vector<1x128xf32> to vector<256x128xf32>
    %9 = arith.addf %6, %8 : vector<256x128xf32>
    %c0_7 = arith.constant 0 : index
    %c0_8 = arith.constant 0 : index
    %10 = vector.load %arg4[%c0_7, %c0_8] : memref<1x128xf32, #tpu.memory_space<vmem>>, vector<1x128xf32>
    %c0_9 = arith.constant 0 : index
    %c0_10 = arith.constant 0 : index
    %11 = vector.load %arg5[%c0_9, %c0_10] : memref<1x128xf32, #tpu.memory_space<vmem>>, vector<1x128xf32>
    %cst_11 = arith.constant dense<0.000000e+00> : vector<128xf32>
    %12 = vector.multi_reduction <add>, %9, %cst_11 [0] : vector<256x128xf32> to vector<128xf32>
    %13 = vector.shape_cast %12 : vector<128xf32> to vector<1x128xf32>
    %cst_12 = arith.constant 2.560000e+02 : f32
    %14 = vector.broadcast %cst_12 : f32 to vector<1x128xf32>
    %15 = arith.divf %13, %14 : vector<1x128xf32>
    %16 = vector.broadcast %15 : vector<1x128xf32> to vector<256x128xf32>
    %17 = arith.subf %9, %16 : vector<256x128xf32>
    %18 = arith.mulf %17, %17 : vector<256x128xf32>
    %cst_13 = arith.constant dense<0.000000e+00> : vector<128xf32>
    %19 = vector.multi_reduction <add>, %18, %cst_13 [0] : vector<256x128xf32> to vector<128xf32>
    %20 = vector.shape_cast %19 : vector<128xf32> to vector<1x128xf32>
    %cst_14 = arith.constant 2.560000e+02 : f32
    %21 = vector.broadcast %cst_14 : f32 to vector<1x128xf32>
    %22 = arith.divf %20, %21 : vector<1x128xf32>
    %23 = vector.broadcast %15 : vector<1x128xf32> to vector<256x128xf32>
    %24 = arith.subf %9, %23 : vector<256x128xf32>
    %cst_15 = arith.constant 9.99999974E-6 : f32
    %25 = vector.broadcast %cst_15 : f32 to vector<1x128xf32>
    %26 = arith.addf %22, %25 : vector<1x128xf32>
    %27 = math.rsqrt %26 : vector<1x128xf32>
    %28 = vector.broadcast %27 : vector<1x128xf32> to vector<256x128xf32>
    %29 = arith.mulf %24, %28 : vector<256x128xf32>
    %30 = vector.broadcast %10 : vector<1x128xf32> to vector<256x128xf32>
    %31 = arith.mulf %29, %30 : vector<256x128xf32>
    %32 = vector.broadcast %11 : vector<1x128xf32> to vector<256x128xf32>
    %33 = arith.addf %31, %32 : vector<256x128xf32>
    %cst_16 = arith.constant 0.000000e+00 : f32
    %34 = vector.broadcast %cst_16 : f32 to vector<256x128xf32>
    %35 = arith.cmpf ogt, %33, %34 : vector<256x128xf32>
    %36 = math.exp %33 : vector<256x128xf32>
    %cst_17 = arith.constant 1.000000e+00 : f32
    %37 = vector.broadcast %cst_17 : f32 to vector<256x128xf32>
    %38 = arith.subf %36, %37 : vector<256x128xf32>
    %39 = arith.select %35, %33, %38 : vector<256x128xi1>, vector<256x128xf32>
    %40 = vector.shape_cast %39 : vector<256x128xf32> to vector<1x16x16x128xf32>
    %c0_18 = arith.constant 0 : index
    %c0_19 = arith.constant 0 : index
    %c0_20 = arith.constant 0 : index
    %c0_21 = arith.constant 0 : index
    %41 = vector.load %arg6[%c0_18, %c0_19, %c0_20, %c0_21] : memref<1x16x16x128xf32, #tpu.memory_space<vmem>>, vector<1x16x16x128xf32>
    tpu.vector_store %arg6[%c0_18, %c0_19, %c0_20, %c0_21], %40 {strides = array<i32>} : memref<1x16x16x128xf32, #tpu.memory_space<vmem>>, vector<1x16x16x128xf32>,
    return
  }
  func.func @transform_0(%arg0: i32) -> (i32, i32, i32, i32) {
    %c0_i32 = arith.constant 0 : i32
    %c0_i32_0 = arith.constant 0 : i32
    %c0_i32_1 = arith.constant 0 : i32
    %c0_i32_2 = arith.constant 0 : i32
    return %arg0, %c0_i32, %c0_i32_0, %c0_i32_1 : i32, i32, i32, i32
  }
  func.func @transform_1(%arg0: i32) -> (i32, i32) {
    %c0_i32 = arith.constant 0 : i32
    %c0_i32_0 = arith.constant 0 : i32
    %c0_i32_1 = arith.constant 0 : i32
    return %c0_i32, %c0_i32_0 : i32, i32
  }
  func.func @transform_2(%arg0: i32) -> (i32, i32) {
    %c0_i32 = arith.constant 0 : i32
    %c0_i32_0 = arith.constant 0 : i32
    %c0_i32_1 = arith.constant 0 : i32
    return %c0_i32, %c0_i32_0 : i32, i32
  }
  func.func @transform_3(%arg0: i32) -> (i32, i32) {
    %c0_i32 = arith.constant 0 : i32
    %c0_i32_0 = arith.constant 0 : i32
    %c0_i32_1 = arith.constant 0 : i32
    return %c0_i32, %c0_i32_0 : i32, i32
  }
  func.func @transform_4(%arg0: i32) -> (i32, i32) {
    %c0_i32 = arith.constant 0 : i32
    %c0_i32_0 = arith.constant 0 : i32
    %c0_i32_1 = arith.constant 0 : i32
    return %c0_i32, %c0_i32_0 : i32, i32
  }
  func.func @transform_5(%arg0: i32) -> (i32, i32, i32, i32) {
    %c0_i32 = arith.constant 0 : i32
    %c0_i32_0 = arith.constant 0 : i32
    %c0_i32_1 = arith.constant 0 : i32
    %c0_i32_2 = arith.constant 0 : i32
    return %arg0, %c0_i32, %c0_i32_0, %c0_i32_1 : i32, i32, i32, i32
  }
}

</mosaic_0001>

<llo_original>
// kernel: tpu_custom_call.1
$region0: #{tpu_custom_call.1}
  #allocation0 [shape = 'u32[]', space=smem, size = 0x4, offset = 0x4, fixed_abs, tag = 'smem constant byte address 0x4 - core index']
  #allocation1 [shape = 'u32[144,128]{1,0:T(1,128)}', space=vmem, size = 0x12000, scoped, tag = 'internal scratch']
  %s0 = inlined_call_operand.hbm [shape: f32[2,16,16,128], index: 0, kind: input, shape index: {}]
  %s1 = inlined_call_operand.hbm [shape: f32[128,128], index: 1, kind: input, shape index: {}]
  %s2 = inlined_call_operand.vmem [shape: f32[1,128], index: 2, kind: input, shape index: {}]
  %s3 = inlined_call_operand.vmem [shape: f32[1,128], index: 3, kind: input, shape index: {}]
  %s4 = inlined_call_operand.vmem [shape: f32[1,128], index: 4, kind: input, shape index: {}]
  %s5 = inlined_call_operand.hbm [shape: f32[2,16,16,128], index: 5, kind: output, shape index: {}]
  %s6 = sld [smem:[#allocation0]]
  $region61: #{tpu_custom_call.1} parent=0
    _
  %s8 = ssub.s32 1, %s6
  %s9 = scalar_select 0, %s8, %s6
  $region1: #{tpu_custom_call.1} parent=0
    #allocation2 [shape = 'u8[262144]{0}', space=vmem, size = 0x40000, scoped, tag = 'input window, operand 0']
    #allocation3 [shape = 's32[2]{0}', space=sflag, size = 0x8, scoped, tag = 'scoped memory for tpu_custom_call.1']
    #allocation4 [shape = 's32[2]{0}', space=sflag, size = 0x8, scoped, tag = 'scoped memory for tpu_custom_call.1']
    #allocation5 [shape = 'u8[65536]{0}', space=vmem, size = 0x10000, scoped, tag = 'input window, operand 1, single buffered']
    #allocation6 [shape = 's32[1]{0}', space=sflag, size = 0x4, scoped, tag = 'scoped memory for tpu_custom_call.1']
    #allocation7 [shape = 'u8[262144]{0}', space=vmem, size = 0x40000, scoped, tag = 'output window, operand 0']
    %10 = vsyncpa [#allocation3], 0
    %s11 = scalar_lea.sflag [#allocation3], 1
    %12 = vsyncpa %s11, 0
    %13 = vsyncpa [#allocation6], 0
    %14 = vsyncpa [#allocation4], 0
    %s15 = scalar_lea.sflag [#allocation4], 1
    %16 = vsyncpa %s15, 0
    loop: start=0, step=1, limit=4
    $region2: #{tpu_custom_call.1} parent=1 // loop_pre_header
      _
    $region3: #{tpu_custom_call.1} parent=1 // loop_header
      %s18 = sphi 0, %s22
      %p19 = scmp.ge.s32.totalorder %s18, 4
      %s28 = sphi 0, %s30
      %s31 = sphi 0, %s28
      %s32 = sphi 0, %s31
      %s48 = sphi 0, %s32
      %s52 = sphi 0, %s52
      %s54 = sphi 0, %s52
      %s55 = sphi 0, %s54
      %s69 = sphi 0, %s55
      %s73 = sphi 0, %s73
      %s75 = sphi 0, %s73
      %s76 = sphi 0, %s75
      %s90 = sphi 0, %s76
      %s94 = sphi 0, %s94
      %s96 = sphi 0, %s94
      %s97 = sphi 0, %s96
      %s111 = sphi 0, %s97
      %s115 = sphi 0, %s115
      %s117 = sphi 0, %s115
      %s118 = sphi 0, %s117
      %s132 = sphi 0, %s118
      %s138 = sphi 0, %s140
      %s141 = sphi 0, %s138
      %s142 = sphi 0, %s141
      %s158 = sphi 0, %s142
    $region4: #{tpu_custom_call.1} parent=1 // loop_header_branch
      %21 = sbr.rel (%p19) target = $region8
    $region5: #{tpu_custom_call.1} parent=1 // loop_body
      %s23 = ssub.s32 %s18, 1
      %s24 = ssub.s32 %s18, 2
      %s25 = sadd.s32 %s18, 1
      %s26 = ssub.s32 %s18, %s25
      %p27 = scmp.eq.s32.totalorder %s26, 0
      %s29 = sadd.s32 %s28, 1
      %s30 = scalar_select %p27, %s28, %s29
      %p33 = pneg %p27
      %p34 = scmp.eq.s32.totalorder %s18, 1
      %p35 = por %p33, %p34
      %p36 = scmp.ne.s32.totalorder %s28, %s31
      %p37 = scmp.eq.s32.totalorder %s18, 0
      %p38 = por %p36, %p37
      %p39 = scmp.ne.s32.totalorder %s28, %s31
      %p40 = scmp.eq.s32.totalorder %s23, 1
      %p41 = por %p39, %p40
      %p42 = scmp.ne.s32.totalorder %s31, %s32
      %p43 = scmp.eq.s32.totalorder %s23, 0
      %p44 = por %p42, %p43
      %p45 = scmp.ne.s32.totalorder %s31, %s32
      %p46 = scmp.eq.s32.totalorder %s24, 1
      %p47 = por %p45, %p46
      %p49 = scmp.ne.s32.totalorder %s32, %s48
      %p50 = scmp.eq.s32.totalorder %s24, 0
      %p51 = por %p49, %p50
      %s53 = sadd.s32 %s52, 1
      %p56 = scmp.eq.s32.totalorder %s18, 1
      %p57 = scmp.ne.s32.totalorder %s52, %s54
      %p58 = scmp.eq.s32.totalorder %s18, 0
      %p59 = por %p57, %p58
      %p60 = scmp.ne.s32.totalorder %s52, %s54
      %p61 = scmp.eq.s32.totalorder %s23, 1
      %p62 = por %p60, %p61
      %p63 = scmp.ne.s32.totalorder %s54, %s55
      %p64 = scmp.eq.s32.totalorder %s23, 0
      %p65 = por %p63, %p64
      %p66 = scmp.ne.s32.totalorder %s54, %s55
      %p67 = scmp.eq.s32.totalorder %s24, 1
      %p68 = por %p66, %p67
      %p70 = scmp.ne.s32.totalorder %s55, %s69
      %p71 = scmp.eq.s32.totalorder %s24, 0
      %p72 = por %p70, %p71
      %s74 = sadd.s32 %s73, 1
      %p77 = scmp.eq.s32.totalorder %s18, 1
      %p78 = scmp.ne.s32.totalorder %s73, %s75
      %p79 = scmp.eq.s32.totalorder %s18, 0
      %p80 = por %p78, %p79
      %p81 = scmp.ne.s32.totalorder %s73, %s75
      %p82 = scmp.eq.s32.totalorder %s23, 1
      %p83 = por %p81, %p82
      %p84 = scmp.ne.s32.totalorder %s75, %s76
      %p85 = scmp.eq.s32.totalorder %s23, 0
      %p86 = por %p84, %p85
      %p87 = scmp.ne.s32.totalorder %s75, %s76
      %p88 = scmp.eq.s32.totalorder %s24, 1
      %p89 = por %p87, %p88
      %p91 = scmp.ne.s32.totalorder %s76, %s90
      %p92 = scmp.eq.s32.totalorder %s24, 0
      %p93 = por %p91, %p92
      %s95 = sadd.s32 %s94, 1
      %p98 = scmp.eq.s32.totalorder %s18, 1
      %p99 = scmp.ne.s32.totalorder %s94, %s96
      %p100 = scmp.eq.s32.totalorder %s18, 0
      %p101 = por %p99, %p100
      %p102 = scmp.ne.s32.totalorder %s94, %s96
      %p103 = scmp.eq.s32.totalorder %s23, 1
      %p104 = por %p102, %p103
      %p105 = scmp.ne.s32.totalorder %s96, %s97
      %p106 = scmp.eq.s32.totalorder %s23, 0
      %p107 = por %p105, %p106
      %p108 = scmp.ne.s32.totalorder %s96, %s97
      %p109 = scmp.eq.s32.totalorder %s24, 1
      %p110 = por %p108, %p109
      %p112 = scmp.ne.s32.totalorder %s97, %s111
      %p113 = scmp.eq.s32.totalorder %s24, 0
      %p114 = por %p112, %p113
      %s116 = sadd.s32 %s115, 1
      %p119 = scmp.eq.s32.totalorder %s18, 1
      %p120 = scmp.ne.s32.totalorder %s115, %s117
      %p121 = scmp.eq.s32.totalorder %s18, 0
      %p122 = por %p120, %p121
      %p123 = scmp.ne.s32.totalorder %s115, %s117
      %p124 = scmp.eq.s32.totalorder %s23, 1
      %p125 = por %p123, %p124
      %p126 = scmp.ne.s32.totalorder %s117, %s118
      %p127 = scmp.eq.s32.totalorder %s23, 0
      %p128 = por %p126, %p127
      %p129 = scmp.ne.s32.totalorder %s117, %s118
      %p130 = scmp.eq.s32.totalorder %s24, 1
      %p131 = por %p129, %p130
      %p133 = scmp.ne.s32.totalorder %s118, %s132
      %p134 = scmp.eq.s32.totalorder %s24, 0
      %p135 = por %p133, %p134
      %s136 = ssub.s32 %s18, %s25
      %p137 = scmp.eq.s32.totalorder %s136, 0
      %s139 = sadd.s32 %s138, 1
      %s140 = scalar_select %p137, %s138, %s139
      %p143 = pneg %p137
      %p144 = scmp.eq.s32.totalorder %s18, 1
      %p145 = por %p143, %p144
      %p146 = scmp.ne.s32.totalorder %s138, %s141
      %p147 = scmp.eq.s32.totalorder %s18, 0
      %p148 = por %p146, %p147
      %p149 = scmp.ne.s32.totalorder %s138, %s141
      %p150 = scmp.eq.s32.totalorder %s23, 1
      %p151 = por %p149, %p150
      %p152 = scmp.ne.s32.totalorder %s141, %s142
      %p153 = scmp.eq.s32.totalorder %s23, 0
      %p154 = por %p152, %p153
      %p155 = scmp.ne.s32.totalorder %s141, %s142
      %p156 = scmp.eq.s32.totalorder %s24, 1
      %p157 = por %p155, %p156
      %p159 = scmp.ne.s32.totalorder %s142, %s158
      %p160 = scmp.eq.s32.totalorder %s24, 0
      %p161 = por %p159, %p160
      %p162 = scmp.le.s32.totalorder 1, %s18
      %p163 = scmp.lt.s32.totalorder %s18, 3
      %p164 = pnand %p162, %p163
      %p165 = pneg %p164
      // Predicated region
      $region9: #{tpu_custom_call.1} parent=5 // pred_check
        _
      $region10: #{tpu_custom_call.1} parent=5 // pred_check_branch
        %167 = sbr.rel (%p164) target = $region12
      $region11: #{tpu_custom_call.1} parent=5 // pred_region
        %s168 = ssub.s32 %s18, 1
        // Predicated region
        $region13: #{tpu_custom_call.1} parent=11 // pred_check
          %p169 = pneg %p65
        $region14: #{tpu_custom_call.1} parent=11 // pred_check_branch
          %171 = sbr.rel (%p169) target = $region16
        $region15: #{tpu_custom_call.1} parent=11 // pred_region
          %s173 = ssub.s32 2048, 2048
          %174 = vsyncadd [#allocation6], %s173
          %s175 = sshll.u32 [#allocation5], 4
          %s176 = int_to_ptr.vmem [resolvable:$true] %s175
          %181 = dma.hbm_to_vmem [thread:$0]  %s1, 2048, %s176, [#allocation6], 128, 128, 8
        $region16: #{tpu_custom_call.1} parent=11 // pred_fallthru
          _
        // Predicated region
        $region17: #{tpu_custom_call.1} parent=11 // pred_check
          %p182 = pneg %p86
        $region18: #{tpu_custom_call.1} parent=11 // pred_check_branch
          %184 = sbr.rel (%p182) target = $region20
        $region19: #{tpu_custom_call.1} parent=11 // pred_region
          _
        $region20: #{tpu_custom_call.1} parent=11 // pred_fallthru
          _
        // Predicated region
        $region21: #{tpu_custom_call.1} parent=11 // pred_check
          %p185 = pneg %p107
        $region22: #{tpu_custom_call.1} parent=11 // pred_check_branch
          %187 = sbr.rel (%p185) target = $region24
        $region23: #{tpu_custom_call.1} parent=11 // pred_region
          _
        $region24: #{tpu_custom_call.1} parent=11 // pred_fallthru
          _
        // Predicated region
        $region25: #{tpu_custom_call.1} parent=11 // pred_check
          %p188 = pneg %p128
        $region26: #{tpu_custom_call.1} parent=11 // pred_check_branch
          %190 = sbr.rel (%p188) target = $region28
        $region27: #{tpu_custom_call.1} parent=11 // pred_region
          _
        $region28: #{tpu_custom_call.1} parent=11 // pred_fallthru
          _
      $region12: #{tpu_custom_call.1} parent=5 // pred_fallthru
        _
      %p191 = scmp.lt.s32.totalorder %s18, 2
      // Predicated region
      $region29: #{tpu_custom_call.1} parent=5 // pred_check
        %p192 = pneg %p191
      $region30: #{tpu_custom_call.1} parent=5 // pred_check_branch
        %194 = sbr.rel (%p192) target = $region32
      $region31: #{tpu_custom_call.1} parent=5 // pred_region
        // Predicated region
        $region33: #{tpu_custom_call.1} parent=31 // pred_check
          %p195 = pneg %p38
        $region34: #{tpu_custom_call.1} parent=31 // pred_check_branch
          %197 = sbr.rel (%p195) target = $region36
        $region35: #{tpu_custom_call.1} parent=31 // pred_region
          %s198 = sand.u32 %s28, 1
          %s199 = scalar_lea.sflag [#allocation3], %s198
          %s200 = sand.u32 %s28, 1
          %s201 = smul.addr %s200, 256
          %s202 = scalar_lea.vmem [#allocation2], %s201
          %s204 = ssub.s32 4096, 4096
          %205 = vsyncadd %s199, %s204
          %s206 = smul.addr %s18, 32
          %s207 = smul.addr %s206, 128
          %s208 = scalar_lea.hbm %s0, %s207
          %s209 = sshll.u32 %s202, 4
          %s210 = int_to_ptr.vmem [resolvable:$true] %s209
          %215 = dma.hbm_to_vmem [thread:$0]  %s208, 4096, %s210, %s199, 128, 128, 8
        $region36: #{tpu_custom_call.1} parent=31 // pred_fallthru
          _
      $region32: #{tpu_custom_call.1} parent=5 // pred_fallthru
        _
      %p216 = scmp.le.s32.totalorder 1, %s18
      %p217 = scmp.lt.s32.totalorder %s18, 3
      %p218 = pnand %p216, %p217
      %p219 = pneg %p218
      // Predicated region
      $region37: #{tpu_custom_call.1} parent=5 // pred_check
        _
      $region38: #{tpu_custom_call.1} parent=5 // pred_check_branch
        %221 = sbr.rel (%p218) target = $region40
      $region39: #{tpu_custom_call.1} parent=5 // pred_region
        %s222 = ssub.s32 %s18, 1
        %s223 = sand.u32 %s31, 1
        %s224 = scalar_lea.sflag [#allocation3], %s223
        %s225 = sand.u32 %s31, 1
        %s226 = smul.addr %s225, 256
        %s227 = scalar_lea.vmem [#allocation2], %s226
        // Predicated region
        $region41: #{tpu_custom_call.1} parent=39 // pred_check
          %p228 = pneg %p44
        $region42: #{tpu_custom_call.1} parent=39 // pred_check_branch
          %230 = sbr.rel (%p228) target = $region44
        $region43: #{tpu_custom_call.1} parent=39 // pred_region
          %231 = dma.done %s224, 4096
        $region44: #{tpu_custom_call.1} parent=39 // pred_fallthru
          _
        // Predicated region
        $region45: #{tpu_custom_call.1} parent=39 // pred_check
          %p232 = pneg %p65
        $region46: #{tpu_custom_call.1} parent=39 // pred_check_branch
          %234 = sbr.rel (%p232) target = $region48
        $region47: #{tpu_custom_call.1} parent=39 // pred_region
          %235 = dma.done [#allocation6], 2048
        $region48: #{tpu_custom_call.1} parent=39 // pred_fallthru
          _
        %s236 = sand.u32 %s31, 1
        %s237 = scalar_lea.sflag [#allocation3], %s236
        %s238 = sand.u32 %s31, 1
        %s239 = smul.addr %s238, 256
        %s240 = scalar_lea.vmem [#allocation2], %s239
        %p241 = pneg %p44
        %p242 = pneg %p41
        %p243 = pneg %p65
        %p244 = pneg %p62
        %p245 = pneg %p86
        %p246 = pneg %p83
        %p247 = pneg %p107
        %p248 = pneg %p104
        %p249 = pneg %p128
        %p250 = pneg %p125
        %p251 = pneg %p154
        %p252 = pneg %p151
        %s253 = sand.u32 %s141, 1
        %s254 = scalar_lea.sflag [#allocation4], %s253
        %s255 = sand.u32 %s141, 1
        %s256 = smul.addr %s255, 256
        %s257 = scalar_lea.vmem [#allocation7], %s256
        %v259 = vld [vmem:[%s227] sm:$0xff]
        %v260 = vld [vmem:[%s227 + $0x8] sm:$0xff]
        %v261 = vld [vmem:[%s227 + $0x10] sm:$0xff]
        %v262 = vld [vmem:[%s227 + $0x18] sm:$0xff]
        %v263 = vld [vmem:[%s227 + $0x20] sm:$0xff]
        %v264 = vld [vmem:[%s227 + $0x28] sm:$0xff]
        %v265 = vld [vmem:[%s227 + $0x30] sm:$0xff]
        %v266 = vld [vmem:[%s227 + $0x38] sm:$0xff]
        %v267 = vld [vmem:[%s227 + $0x40] sm:$0xff]
        %v268 = vld [vmem:[%s227 + $0x48] sm:$0xff]
        %v269 = vld [vmem:[%s227 + $0x50] sm:$0xff]
        %v270 = vld [vmem:[%s227 + $0x58] sm:$0xff]
        %v271 = vld [vmem:[%s227 + $0x60] sm:$0xff]
        %v272 = vld [vmem:[%s227 + $0x68] sm:$0xff]
        %v273 = vld [vmem:[%s227 + $0x70] sm:$0xff]
        %v274 = vld [vmem:[%s227 + $0x78] sm:$0xff]
        %v275 = vld [vmem:[%s227 + $0x80] sm:$0xff]
        %v276 = vld [vmem:[%s227 + $0x88] sm:$0xff]
        %v277 = vld [vmem:[%s227 + $0x90] sm:$0xff]
        %v278 = vld [vmem:[%s227 + $0x98] sm:$0xff]
        %v279 = vld [vmem:[%s227 + $0xa0] sm:$0xff]
        %v280 = vld [vmem:[%s227 + $0xa8] sm:$0xff]
        %v281 = vld [vmem:[%s227 + $0xb0] sm:$0xff]
        %v282 = vld [vmem:[%s227 + $0xb8] sm:$0xff]
        %v283 = vld [vmem:[%s227 + $0xc0] sm:$0xff]
        %v284 = vld [vmem:[%s227 + $0xc8] sm:$0xff]
        %v285 = vld [vmem:[%s227 + $0xd0] sm:$0xff]
        %v286 = vld [vmem:[%s227 + $0xd8] sm:$0xff]
        %v287 = vld [vmem:[%s227 + $0xe0] sm:$0xff]
        %v288 = vld [vmem:[%s227 + $0xe8] sm:$0xff]
        %v289 = vld [vmem:[%s227 + $0xf0] sm:$0xff]
        %v290 = vld [vmem:[%s227 + $0xf8] sm:$0xff]
        %v291 = vpack.c.bf16 %v260, %v259
        %v292 = vpack.c.bf16 %v262, %v261
        %v293 = vpack.c.bf16 %v264, %v263
        %v294 = vpack.c.bf16 %v266, %v265
        %v295 = vpack.c.bf16 %v268, %v267
        %v296 = vpack.c.bf16 %v270, %v269
        %v297 = vpack.c.bf16 %v272, %v271
        %v298 = vpack.c.bf16 %v274, %v273
        %v299 = vpack.c.bf16 %v276, %v275
        %v300 = vpack.c.bf16 %v278, %v277
        %v301 = vpack.c.bf16 %v280, %v279
        %v302 = vpack.c.bf16 %v282, %v281
        %v303 = vpack.c.bf16 %v284, %v283
        %v304 = vpack.c.bf16 %v286, %v285
        %v305 = vpack.c.bf16 %v288, %v287
        %v306 = vpack.c.bf16 %v290, %v289
        %v307 = vld [vmem:[#allocation5] sm:$0xff]
        %v308 = vld [vmem:[#allocation5 + $0x8] sm:$0xff]
        %v309 = vld [vmem:[#allocation5 + $0x10] sm:$0xff]
        %v310 = vld [vmem:[#allocation5 + $0x18] sm:$0xff]
        %v311 = vld [vmem:[#allocation5 + $0x20] sm:$0xff]
        %v312 = vld [vmem:[#allocation5 + $0x28] sm:$0xff]
        %v313 = vld [vmem:[#allocation5 + $0x30] sm:$0xff]
        %v314 = vld [vmem:[#allocation5 + $0x38] sm:$0xff]
        %v315 = vld [vmem:[#allocation5 + $0x40] sm:$0xff]
        %v316 = vld [vmem:[#allocation5 + $0x48] sm:$0xff]
        %v317 = vld [vmem:[#allocation5 + $0x50] sm:$0xff]
        %v318 = vld [vmem:[#allocation5 + $0x58] sm:$0xff]
        %v319 = vld [vmem:[#allocation5 + $0x60] sm:$0xff]
        %v320 = vld [vmem:[#allocation5 + $0x68] sm:$0xff]
        %v321 = vld [vmem:[#allocation5 + $0x70] sm:$0xff]
        %v322 = vld [vmem:[#allocation5 + $0x78] sm:$0xff]
        %v323 = vpack.c.bf16 %v308, %v307
        %v324 = vpack.c.bf16 %v310, %v309
        %v325 = vpack.c.bf16 %v312, %v311
        %v326 = vpack.c.bf16 %v314, %v313
        %v327 = vpack.c.bf16 %v316, %v315
        %v328 = vpack.c.bf16 %v318, %v317
        %v329 = vpack.c.bf16 %v320, %v319
        %v330 = vpack.c.bf16 %v322, %v321
        %v331 = vld [vmem:[%s2] sm:$0x1]
        %v333 = vlaneseq
        %v334 = vshrl.u32 %v333, 7
        %v335 = vsub.s32 0, %v334
        %v336 = vrot.slane %v331, %v335
        %338 = vmatprep.subr.bf16.mxu0 0
        %339 = vmatpush1.bf16.msra.mxu0 %v323
        %340 = vmatprep.subr.bf16.mxu0 0
        %341 = vmatpush1.bf16.msra.mxu0 %v324
        %342 = vmatprep.subr.bf16.mxu0 0
        %343 = vmatpush1.bf16.msra.mxu0 %v325
        %344 = vmatprep.subr.bf16.mxu0 0
        %345 = vmatpush1.bf16.msra.mxu0 %v326
        %346 = vmatprep.subr.bf16.mxu0 0
        %347 = vmatpush1.bf16.msra.mxu0 %v327
        %348 = vmatprep.subr.bf16.mxu0 0
        %349 = vmatpush1.bf16.msra.mxu0 %v328
        %350 = vmatprep.subr.bf16.mxu0 0
        %351 = vmatpush1.bf16.msra.mxu0 %v329
        %352 = vmatprep.subr.bf16.mxu0 0
        %353 = vmatpush1.bf16.msra.mxu0 %v330
        %354 = vmatprep.subr.bf16.mxu0 0
        %355 = vmatpush1.bf16.msra.mxu0 0
        %356 = vmatprep.subr.bf16.mxu0 0
        %357 = vmatpush1.bf16.msra.mxu0 0
        %358 = vmatprep.subr.bf16.mxu0 0
        %359 = vmatpush1.bf16.msra.mxu0 0
        %360 = vmatprep.subr.bf16.mxu0 0
        %361 = vmatpush1.bf16.msra.mxu0 0
        %362 = vmatprep.subr.bf16.mxu0 0
        %363 = vmatpush1.bf16.msra.mxu0 0
        %364 = vmatprep.subr.bf16.mxu0 0
        %365 = vmatpush1.bf16.msra.mxu0 0
        %366 = vmatprep.subr.bf16.mxu0 0
        %367 = vmatpush1.bf16.msra.mxu0 0
        %368 = vmatprep.subr.bf16.mxu0 0
        %369 = vmatpush1.bf16.msra.mxu0 0
        %370 = vmatprep.mubr.bf16.mxu0 0
        %371 = vmatmul.mubr.bf16.gmra.mrb[0].mxu0 %v291
        %v372 = vpop.f32.mrb[0].mxu0
        %v373 = vadd.f32 %v336, %v372
        %v374 = vpop.f32.mrb[0].mxu0
        %v375 = vpop.f32.mrb[0].mxu0
        %v376 = vadd.f32 %v336, %v375
        %v377 = vpop.f32.mrb[0].mxu0
        %378 = vmatprep.mubr.bf16.mxu0 0
        %379 = vmatmul.mubr.bf16.gmra.mrb[0].mxu0 %v292
        %v380 = vpop.f32.mrb[0].mxu0
        %v381 = vadd.f32 %v336, %v380
        %v382 = vpop.f32.mrb[0].mxu0
        %v383 = vpop.f32.mrb[0].mxu0
        %v384 = vadd.f32 %v336, %v383
        %v385 = vpop.f32.mrb[0].mxu0
        %386 = vmatprep.mubr.bf16.mxu0 0
        %387 = vmatmul.mubr.bf16.gmra.mrb[0].mxu0 %v293
        %v388 = vpop.f32.mrb[0].mxu0
        %v389 = vadd.f32 %v336, %v388
        %v390 = vpop.f32.mrb[0].mxu0
        %v391 = vpop.f32.mrb[0].mxu0
        %v392 = vadd.f32 %v336, %v391
        %v393 = vpop.f32.mrb[0].mxu0
        %394 = vmatprep.mubr.bf16.mxu0 0
        %395 = vmatmul.mubr.bf16.gmra.mrb[0].mxu0 %v294
        %v396 = vpop.f32.mrb[0].mxu0
        %v397 = vadd.f32 %v336, %v396
        %v398 = vpop.f32.mrb[0].mxu0
        %v399 = vpop.f32.mrb[0].mxu0
        %v400 = vadd.f32 %v336, %v399
        %v401 = vpop.f32.mrb[0].mxu0
        %402 = vmatprep.mubr.bf16.mxu0 0
        %403 = vmatmul.mubr.bf16.gmra.mrb[0].mxu0 %v295
        %v404 = vpop.f32.mrb[0].mxu0
        %v405 = vadd.f32 %v336, %v404
        %v406 = vpop.f32.mrb[0].mxu0
        %v407 = vpop.f32.mrb[0].mxu0
        %v408 = vadd.f32 %v336, %v407
        %v409 = vpop.f32.mrb[0].mxu0
        %410 = vmatprep.mubr.bf16.mxu0 0
        %411 = vmatmul.mubr.bf16.gmra.mrb[0].mxu0 %v296
        %v412 = vpop.f32.mrb[0].mxu0
        %v413 = vadd.f32 %v336, %v412
        %v414 = vpop.f32.mrb[0].mxu0
        %v415 = vpop.f32.mrb[0].mxu0
        %v416 = vadd.f32 %v336, %v415
        %v417 = vpop.f32.mrb[0].mxu0
        %418 = vmatprep.mubr.bf16.mxu0 0
        %419 = vmatmul.mubr.bf16.gmra.mrb[0].mxu0 %v297
        %v420 = vpop.f32.mrb[0].mxu0
        %v421 = vadd.f32 %v336, %v420
        %v422 = vpop.f32.mrb[0].mxu0
        %v423 = vpop.f32.mrb[0].mxu0
        %v424 = vadd.f32 %v336, %v423
        %v425 = vpop.f32.mrb[0].mxu0
        %426 = vmatprep.mubr.bf16.mxu0 0
        %427 = vmatmul.mubr.bf16.gmra.mrb[0].mxu0 %v298
        %v428 = vpop.f32.mrb[0].mxu0
        %v429 = vadd.f32 %v336, %v428
        %v430 = vpop.f32.mrb[0].mxu0
        %v431 = vpop.f32.mrb[0].mxu0
        %v432 = vadd.f32 %v336, %v431
        %v433 = vpop.f32.mrb[0].mxu0
        %434 = vmatprep.mubr.bf16.mxu0 0
        %435 = vmatmul.mubr.bf16.gmra.mrb[0].mxu0 %v299
        %v436 = vpop.f32.mrb[0].mxu0
        %v437 = vadd.f32 %v336, %v436
        %v438 = vpop.f32.mrb[0].mxu0
        %v439 = vpop.f32.mrb[0].mxu0
        %v440 = vadd.f32 %v336, %v439
        %v441 = vpop.f32.mrb[0].mxu0
        %442 = vmatprep.mubr.bf16.mxu0 0
        %443 = vmatmul.mubr.bf16.gmra.mrb[0].mxu0 %v300
        %v444 = vpop.f32.mrb[0].mxu0
        %v445 = vadd.f32 %v336, %v444
        %v446 = vpop.f32.mrb[0].mxu0
        %v447 = vpop.f32.mrb[0].mxu0
        %v448 = vadd.f32 %v336, %v447
        %v449 = vpop.f32.mrb[0].mxu0
        %450 = vmatprep.mubr.bf16.mxu0 0
        %451 = vmatmul.mubr.bf16.gmra.mrb[0].mxu0 %v301
        %v452 = vpop.f32.mrb[0].mxu0
        %v453 = vadd.f32 %v336, %v452
        %v454 = vpop.f32.mrb[0].mxu0
        %v455 = vpop.f32.mrb[0].mxu0
        %v456 = vadd.f32 %v336, %v455
        %v457 = vpop.f32.mrb[0].mxu0
        %458 = vmatprep.mubr.bf16.mxu0 0
        %459 = vmatmul.mubr.bf16.gmra.mrb[0].mxu0 %v302
        %v460 = vpop.f32.mrb[0].mxu0
        %v461 = vadd.f32 %v336, %v460
        %v462 = vpop.f32.mrb[0].mxu0
        %v463 = vpop.f32.mrb[0].mxu0
        %v464 = vadd.f32 %v336, %v463
        %v465 = vpop.f32.mrb[0].mxu0
        %466 = vmatprep.mubr.bf16.mxu0 0
        %467 = vmatmul.mubr.bf16.gmra.mrb[0].mxu0 %v303
        %v468 = vpop.f32.mrb[0].mxu0
        %v469 = vadd.f32 %v336, %v468
        %v470 = vpop.f32.mrb[0].mxu0
        %v471 = vpop.f32.mrb[0].mxu0
        %v472 = vadd.f32 %v336, %v471
        %v473 = vpop.f32.mrb[0].mxu0
        %474 = vmatprep.mubr.bf16.mxu0 0
        %475 = vmatmul.mubr.bf16.gmra.mrb[0].mxu0 %v304
        %v476 = vpop.f32.mrb[0].mxu0
        %v477 = vadd.f32 %v336, %v476
        %v478 = vpop.f32.mrb[0].mxu0
        %v479 = vpop.f32.mrb[0].mxu0
        %v480 = vadd.f32 %v336, %v479
        %v481 = vpop.f32.mrb[0].mxu0
        %482 = vmatprep.mubr.bf16.mxu0 0
        %483 = vmatmul.mubr.bf16.gmra.mrb[0].mxu0 %v305
        %v484 = vpop.f32.mrb[0].mxu0
        %v485 = vadd.f32 %v336, %v484
        %v486 = vpop.f32.mrb[0].mxu0
        %v487 = vpop.f32.mrb[0].mxu0
        %v488 = vadd.f32 %v336, %v487
        %v489 = vpop.f32.mrb[0].mxu0
        %490 = vmatprep.mubr.bf16.mxu0 0
        %491 = vmatmul.mubr.bf16.gmra.mrb[0].mxu0 %v306
        %v492 = vpop.f32.mrb[0].mxu0
        %v493 = vadd.f32 %v336, %v492
        %v494 = vpop.f32.mrb[0].mxu0
        %v495 = vpop.f32.mrb[0].mxu0
        %v496 = vadd.f32 %v336, %v495
        %v497 = vpop.f32.mrb[0].mxu0
        %498 = vdwg.mxu0
        %v499 = vld [vmem:[%s3] sm:$0x1]
        %v500 = vld [vmem:[%s4] sm:$0x1]
        %v501 = vadd.f32 %v373, %v376
        %v502 = vadd.f32 %v501, %v381
        %v503 = vadd.f32 %v502, %v384
        %v504 = vadd.f32 %v503, %v389
        %v505 = vadd.f32 %v504, %v392
        %v506 = vadd.f32 %v505, %v397
        %v507 = vadd.f32 %v506, %v400
        %v508 = vadd.f32 %v507, %v405
        %v509 = vadd.f32 %v508, %v408
        %v510 = vadd.f32 %v509, %v413
        %v511 = vadd.f32 %v510, %v416
        %v512 = vadd.f32 %v511, %v421
        %v513 = vadd.f32 %v512, %v424
        %v514 = vadd.f32 %v513, %v429
        %v515 = vadd.f32 %v514, %v432
        %v516 = vadd.f32 %v515, %v437
        %v517 = vadd.f32 %v516, %v440
        %v518 = vadd.f32 %v517, %v445
        %v519 = vadd.f32 %v518, %v448
        %v520 = vadd.f32 %v519, %v453
        %v521 = vadd.f32 %v520, %v456
        %v522 = vadd.f32 %v521, %v461
        %v523 = vadd.f32 %v522, %v464
        %v524 = vadd.f32 %v523, %v469
        %v525 = vadd.f32 %v524, %v472
        %v526 = vadd.f32 %v525, %v477
        %v527 = vadd.f32 %v526, %v480
        %v528 = vadd.f32 %v527, %v485
        %v529 = vadd.f32 %v528, %v488
        %v530 = vadd.f32 %v529, %v493
        %v531 = vadd.f32 %v530, %v496
        %v532 = vrot.slane %v531, 4
        %v533 = vadd.f32 %v531, %v532
        %v534 = vrot.slane %v533, 2
        %v535 = vadd.f32 %v533, %v534
        %v536 = vrot.slane %v535, 1
        %v537 = vadd.f32 %v535, %v536
        %v538 = vrcp.pop 256.0
        %v539 = vmul.f32 %v537, %v538
        %v540 = vsub.f32 %v373, %v539
        %v541 = vsub.f32 %v376, %v539
        %v542 = vsub.f32 %v381, %v539
        %v543 = vsub.f32 %v384, %v539
        %v544 = vsub.f32 %v389, %v539
        %v545 = vsub.f32 %v392, %v539
        %v546 = vsub.f32 %v397, %v539
        %v547 = vsub.f32 %v400, %v539
        %v548 = vsub.f32 %v405, %v539
        %v549 = vsub.f32 %v408, %v539
        %v550 = vsub.f32 %v413, %v539
        %v551 = vsub.f32 %v416, %v539
        %v552 = vsub.f32 %v421, %v539
        %v553 = vsub.f32 %v424, %v539
        %v554 = vsub.f32 %v429, %v539
        %v555 = vsub.f32 %v432, %v539
        %v556 = vsub.f32 %v437, %v539
        %v557 = vsub.f32 %v440, %v539
        %v558 = vsub.f32 %v445, %v539
        %v559 = vsub.f32 %v448, %v539
        %v560 = vsub.f32 %v453, %v539
        %v561 = vsub.f32 %v456, %v539
        %v562 = vsub.f32 %v461, %v539
        %v563 = vsub.f32 %v464, %v539
        %v564 = vsub.f32 %v469, %v539
        %v565 = vsub.f32 %v472, %v539
        %v566 = vsub.f32 %v477, %v539
        %v567 = vsub.f32 %v480, %v539
        %v568 = vsub.f32 %v485, %v539
        %v569 = vsub.f32 %v488, %v539
        %v570 = vsub.f32 %v493, %v539
        %v571 = vsub.f32 %v496, %v539
        %v572 = vmul.f32 %v540, %v540
        %v573 = vmul.f32 %v541, %v541
        %v574 = vmul.f32 %v542, %v542
        %v575 = vmul.f32 %v543, %v543
        %v576 = vmul.f32 %v544, %v544
        %v577 = vmul.f32 %v545, %v545
        %v578 = vmul.f32 %v546, %v546
        %v579 = vmul.f32 %v547, %v547
        %v580 = vmul.f32 %v548, %v548
        %v581 = vmul.f32 %v549, %v549
        %v582 = vmul.f32 %v550, %v550
        %v583 = vmul.f32 %v551, %v551
        %v584 = vmul.f32 %v552, %v552
        %v585 = vmul.f32 %v553, %v553
        %v586 = vmul.f32 %v554, %v554
        %v587 = vmul.f32 %v555, %v555
        %v588 = vmul.f32 %v556, %v556
        %v589 = vmul.f32 %v557, %v557
        %v590 = vmul.f32 %v558, %v558
        %v591 = vmul.f32 %v559, %v559
        %v592 = vmul.f32 %v560, %v560
        %v593 = vmul.f32 %v561, %v561
        %v594 = vmul.f32 %v562, %v562
        %v595 = vmul.f32 %v563, %v563
        %v596 = vmul.f32 %v564, %v564
        %v597 = vmul.f32 %v565, %v565
        %v598 = vmul.f32 %v566, %v566
        %v599 = vmul.f32 %v567, %v567
        %v600 = vmul.f32 %v568, %v568
        %v601 = vmul.f32 %v569, %v569
        %v602 = vmul.f32 %v570, %v570
        %v603 = vmul.f32 %v571, %v571
        %v604 = vadd.f32 %v572, %v573
        %v605 = vadd.f32 %v604, %v574
        %v606 = vadd.f32 %v605, %v575
        %v607 = vadd.f32 %v606, %v576
        %v608 = vadd.f32 %v607, %v577
        %v609 = vadd.f32 %v608, %v578
        %v610 = vadd.f32 %v609, %v579
        %v611 = vadd.f32 %v610, %v580
        %v612 = vadd.f32 %v611, %v581
        %v613 = vadd.f32 %v612, %v582
        %v614 = vadd.f32 %v613, %v583
        %v615 = vadd.f32 %v614, %v584
        %v616 = vadd.f32 %v615, %v585
        %v617 = vadd.f32 %v616, %v586
        %v618 = vadd.f32 %v617, %v587
        %v619 = vadd.f32 %v618, %v588
        %v620 = vadd.f32 %v619, %v589
        %v621 = vadd.f32 %v620, %v590
        %v622 = vadd.f32 %v621, %v591
        %v623 = vadd.f32 %v622, %v592
        %v624 = vadd.f32 %v623, %v593
        %v625 = vadd.f32 %v624, %v594
        %v626 = vadd.f32 %v625, %v595
        %v627 = vadd.f32 %v626, %v596
        %v628 = vadd.f32 %v627, %v597
        %v629 = vadd.f32 %v628, %v598
        %v630 = vadd.f32 %v629, %v599
        %v631 = vadd.f32 %v630, %v600
        %v632 = vadd.f32 %v631, %v601
        %v633 = vadd.f32 %v632, %v602
        %v634 = vadd.f32 %v633, %v603
        %v635 = vrot.slane %v634, 4
        %v636 = vadd.f32 %v634, %v635
        %v637 = vrot.slane %v636, 2
        %v638 = vadd.f32 %v636, %v637
        %v639 = vrot.slane %v638, 1
        %v640 = vadd.f32 %v638, %v639
        %v641 = vmul.f32 %v640, %v538
        %v642 = vadd.f32 %v641, 1e-05
        %v643 = vrsqrt.pop %v642
        %v644 = vmul.f32 %v540, %v643
        %v645 = vmul.f32 %v541, %v643
        %v646 = vmul.f32 %v542, %v643
        %v647 = vmul.f32 %v543, %v643
        %v648 = vmul.f32 %v544, %v643
        %v649 = vmul.f32 %v545, %v643
        %v650 = vmul.f32 %v546, %v643
        %v651 = vmul.f32 %v547, %v643
        %v652 = vmul.f32 %v548, %v643
        %v653 = vmul.f32 %v549, %v643
        %v654 = vmul.f32 %v550, %v643
        %v655 = vmul.f32 %v551, %v643
        %v656 = vmul.f32 %v552, %v643
        %v657 = vmul.f32 %v553, %v643
        %v658 = vmul.f32 %v554, %v643
        %v659 = vmul.f32 %v555, %v643
        %v660 = vmul.f32 %v556, %v643
        %v661 = vmul.f32 %v557, %v643
        %v662 = vmul.f32 %v558, %v643
        %v663 = vmul.f32 %v559, %v643
        %v664 = vmul.f32 %v560, %v643
        %v665 = vmul.f32 %v561, %v643
        %v666 = vmul.f32 %v562, %v643
        %v667 = vmul.f32 %v563, %v643
        %v668 = vmul.f32 %v564, %v643
        %v669 = vmul.f32 %v565, %v643
        %v670 = vmul.f32 %v566, %v643
        %v671 = vmul.f32 %v567, %v643
        %v672 = vmul.f32 %v568, %v643
        %v673 = vmul.f32 %v569, %v643
        %v674 = vmul.f32 %v570, %v643
        %v675 = vmul.f32 %v571, %v643
        %v677 = vlaneseq
        %v678 = vshrl.u32 %v677, 7
        %v679 = vsub.s32 0, %v678
        %v680 = vrot.slane %v499, %v679
        %v682 = vmul.f32 %v644, %v680
        %v683 = vmul.f32 %v645, %v680
        %v684 = vmul.f32 %v646, %v680
        %v685 = vmul.f32 %v647, %v680
        %v686 = vmul.f32 %v648, %v680
        %v687 = vmul.f32 %v649, %v680
        %v688 = vmul.f32 %v650, %v680
        %v689 = vmul.f32 %v651, %v680
        %v690 = vmul.f32 %v652, %v680
        %v691 = vmul.f32 %v653, %v680
        %v692 = vmul.f32 %v654, %v680
        %v693 = vmul.f32 %v655, %v680
        %v694 = vmul.f32 %v656, %v680
        %v695 = vmul.f32 %v657, %v680
        %v696 = vmul.f32 %v658, %v680
        %v697 = vmul.f32 %v659, %v680
        %v698 = vmul.f32 %v660, %v680
        %v699 = vmul.f32 %v661, %v680
        %v700 = vmul.f32 %v662, %v680
        %v701 = vmul.f32 %v663, %v680
        %v702 = vmul.f32 %v664, %v680
        %v703 = vmul.f32 %v665, %v680
        %v704 = vmul.f32 %v666, %v680
        %v705 = vmul.f32 %v667, %v680
        %v706 = vmul.f32 %v668, %v680
        %v707 = vmul.f32 %v669, %v680
        %v708 = vmul.f32 %v670, %v680
        %v709 = vmul.f32 %v671, %v680
        %v710 = vmul.f32 %v672, %v680
        %v711 = vmul.f32 %v673, %v680
        %v712 = vmul.f32 %v674, %v680
        %v713 = vmul.f32 %v675, %v680
        %v715 = vlaneseq
        %v716 = vshrl.u32 %v715, 7
        %v717 = vsub.s32 0, %v716
        %v718 = vrot.slane %v500, %v717
        %v720 = vadd.f32 %v682, %v718
        %v721 = vadd.f32 %v683, %v718
        %v722 = vadd.f32 %v684, %v718
        %v723 = vadd.f32 %v685, %v718
        %v724 = vadd.f32 %v686, %v718
        %v725 = vadd.f32 %v687, %v718
        %v726 = vadd.f32 %v688, %v718
        %v727 = vadd.f32 %v689, %v718
        %v728 = vadd.f32 %v690, %v718
        %v729 = vadd.f32 %v691, %v718
        %v730 = vadd.f32 %v692, %v718
        %v731 = vadd.f32 %v693, %v718
        %v732 = vadd.f32 %v694, %v718
        %v733 = vadd.f32 %v695, %v718
        %v734 = vadd.f32 %v696, %v718
        %v735 = vadd.f32 %v697, %v718
        %v736 = vadd.f32 %v698, %v718
        %v737 = vadd.f32 %v699, %v718
        %v738 = vadd.f32 %v700, %v718
        %v739 = vadd.f32 %v701, %v718
        %v740 = vadd.f32 %v702, %v718
        %v741 = vadd.f32 %v703, %v718
        %v742 = vadd.f32 %v704, %v718
        %v743 = vadd.f32 %v705, %v718
        %v744 = vadd.f32 %v706, %v718
        %v745 = vadd.f32 %v707, %v718
        %v746 = vadd.f32 %v708, %v718
        %v747 = vadd.f32 %v709, %v718
        %v748 = vadd.f32 %v710, %v718
        %v749 = vadd.f32 %v711, %v718
        %v750 = vadd.f32 %v712, %v718
        %v751 = vadd.f32 %v713, %v718
        %vm752 = vcmp.gt.f32.partialorder %v720, 0.0
        %vm753 = vcmp.gt.f32.partialorder %v721, 0.0
        %vm754 = vcmp.gt.f32.partialorder %v722, 0.0
        %vm755 = vcmp.gt.f32.partialorder %v723, 0.0
        %vm756 = vcmp.gt.f32.partialorder %v724, 0.0
        %vm757 = vcmp.gt.f32.partialorder %v725, 0.0
        %vm758 = vcmp.gt.f32.partialorder %v726, 0.0
        %vm759 = vcmp.gt.f32.partialorder %v727, 0.0
        %vm760 = vcmp.gt.f32.partialorder %v728, 0.0
        %vm761 = vcmp.gt.f32.partialorder %v729, 0.0
        %vm762 = vcmp.gt.f32.partialorder %v730, 0.0
        %vm763 = vcmp.gt.f32.partialorder %v731, 0.0
        %vm764 = vcmp.gt.f32.partialorder %v732, 0.0
        %vm765 = vcmp.gt.f32.partialorder %v733, 0.0
        %vm766 = vcmp.gt.f32.partialorder %v734, 0.0
        %vm767 = vcmp.gt.f32.partialorder %v735, 0.0
        %vm768 = vcmp.gt.f32.partialorder %v736, 0.0
        %vm769 = vcmp.gt.f32.partialorder %v737, 0.0
        %vm770 = vcmp.gt.f32.partialorder %v738, 0.0
        %vm771 = vcmp.gt.f32.partialorder %v739, 0.0
        %vm772 = vcmp.gt.f32.partialorder %v740, 0.0
        %vm773 = vcmp.gt.f32.partialorder %v741, 0.0
        %vm774 = vcmp.gt.f32.partialorder %v742, 0.0
        %vm775 = vcmp.gt.f32.partialorder %v743, 0.0
        %vm776 = vcmp.gt.f32.partialorder %v744, 0.0
        %vm777 = vcmp.gt.f32.partialorder %v745, 0.0
        %vm778 = vcmp.gt.f32.partialorder %v746, 0.0
        %vm779 = vcmp.gt.f32.partialorder %v747, 0.0
        %vm780 = vcmp.gt.f32.partialorder %v748, 0.0
        %vm781 = vcmp.gt.f32.partialorder %v749, 0.0
        %vm782 = vcmp.gt.f32.partialorder %v750, 0.0
        %vm783 = vcmp.gt.f32.partialorder %v751, 0.0
        %v784 = vmul.f32 %v720, 1.442695
        %v785 = vpow.pop %v784
        %v786 = vmul.f32 %v721, 1.442695
        %v787 = vpow.pop %v786
        %v788 = vmul.f32 %v722, 1.442695
        %v789 = vpow.pop %v788
        %v790 = vmul.f32 %v723, 1.442695
        %v791 = vpow.pop %v790
        %v792 = vmul.f32 %v724, 1.442695
        %v793 = vpow.pop %v792
        %v794 = vmul.f32 %v725, 1.442695
        %v795 = vpow.pop %v794
        %v796 = vmul.f32 %v726, 1.442695
        %v797 = vpow.pop %v796
        %v798 = vmul.f32 %v727, 1.442695
        %v799 = vpow.pop %v798
        %v800 = vmul.f32 %v728, 1.442695
        %v801 = vpow.pop %v800
        %v802 = vmul.f32 %v729, 1.442695
        %v803 = vpow.pop %v802
        %v804 = vmul.f32 %v730, 1.442695
        %v805 = vpow.pop %v804
        %v806 = vmul.f32 %v731, 1.442695
        %v807 = vpow.pop %v806
        %v808 = vmul.f32 %v732, 1.442695
        %v809 = vpow.pop %v808
        %v810 = vmul.f32 %v733, 1.442695
        %v811 = vpow.pop %v810
        %v812 = vmul.f32 %v734, 1.442695
        %v813 = vpow.pop %v812
        %v814 = vmul.f32 %v735, 1.442695
        %v815 = vpow.pop %v814
        %v816 = vmul.f32 %v736, 1.442695
        %v817 = vpow.pop %v816
        %v818 = vmul.f32 %v737, 1.442695
        %v819 = vpow.pop %v818
        %v820 = vmul.f32 %v738, 1.442695
        %v821 = vpow.pop %v820
        %v822 = vmul.f32 %v739, 1.442695
        %v823 = vpow.pop %v822
        %v824 = vmul.f32 %v740, 1.442695
        %v825 = vpow.pop %v824
        %v826 = vmul.f32 %v741, 1.442695
        %v827 = vpow.pop %v826
        %v828 = vmul.f32 %v742, 1.442695
        %v829 = vpow.pop %v828
        %v830 = vmul.f32 %v743, 1.442695
        %v831 = vpow.pop %v830
        %v832 = vmul.f32 %v744, 1.442695
        %v833 = vpow.pop %v832
        %v834 = vmul.f32 %v745, 1.442695
        %v835 = vpow.pop %v834
        %v836 = vmul.f32 %v746, 1.442695
        %v837 = vpow.pop %v836
        %v838 = vmul.f32 %v747, 1.442695
        %v839 = vpow.pop %v838
        %v840 = vmul.f32 %v748, 1.442695
        %v841 = vpow.pop %v840
        %v842 = vmul.f32 %v749, 1.442695
        %v843 = vpow.pop %v842
        %v844 = vmul.f32 %v750, 1.442695
        %v845 = vpow.pop %v844
        %v846 = vmul.f32 %v751, 1.442695
        %v847 = vpow.pop %v846
        %v848 = vsub.f32 %v785, 1.0
        %v849 = vsub.f32 %v787, 1.0
        %v850 = vsub.f32 %v789, 1.0
        %v851 = vsub.f32 %v791, 1.0
        %v852 = vsub.f32 %v793, 1.0
        %v853 = vsub.f32 %v795, 1.0
        %v854 = vsub.f32 %v797, 1.0
        %v855 = vsub.f32 %v799, 1.0
        %v856 = vsub.f32 %v801, 1.0
        %v857 = vsub.f32 %v803, 1.0
        %v858 = vsub.f32 %v805, 1.0
        %v859 = vsub.f32 %v807, 1.0
        %v860 = vsub.f32 %v809, 1.0
        %v861 = vsub.f32 %v811, 1.0
        %v862 = vsub.f32 %v813, 1.0
        %v863 = vsub.f32 %v815, 1.0
        %v864 = vsub.f32 %v817, 1.0
        %v865 = vsub.f32 %v819, 1.0
        %v866 = vsub.f32 %v821, 1.0
        %v867 = vsub.f32 %v823, 1.0
        %v868 = vsub.f32 %v825, 1.0
        %v869 = vsub.f32 %v827, 1.0
        %v870 = vsub.f32 %v829, 1.0
        %v871 = vsub.f32 %v831, 1.0
        %v872 = vsub.f32 %v833, 1.0
        %v873 = vsub.f32 %v835, 1.0
        %v874 = vsub.f32 %v837, 1.0
        %v875 = vsub.f32 %v839, 1.0
        %v876 = vsub.f32 %v841, 1.0
        %v877 = vsub.f32 %v843, 1.0
        %v878 = vsub.f32 %v845, 1.0
        %v879 = vsub.f32 %v847, 1.0
        %v880 = vsel %vm752, %v720, %v848
        %v881 = vsel %vm753, %v721, %v849
        %v882 = vsel %vm754, %v722, %v850
        %v883 = vsel %vm755, %v723, %v851
        %v884 = vsel %vm756, %v724, %v852
        %v885 = vsel %vm757, %v725, %v853
        %v886 = vsel %vm758, %v726, %v854
        %v887 = vsel %vm759, %v727, %v855
        %v888 = vsel %vm760, %v728, %v856
        %v889 = vsel %vm761, %v729, %v857
        %v890 = vsel %vm762, %v730, %v858
        %v891 = vsel %vm763, %v731, %v859
        %v892 = vsel %vm764, %v732, %v860
        %v893 = vsel %vm765, %v733, %v861
        %v894 = vsel %vm766, %v734, %v862
        %v895 = vsel %vm767, %v735, %v863
        %v896 = vsel %vm768, %v736, %v864
        %v897 = vsel %vm769, %v737, %v865
        %v898 = vsel %vm770, %v738, %v866
        %v899 = vsel %vm771, %v739, %v867
        %v900 = vsel %vm772, %v740, %v868
        %v901 = vsel %vm773, %v741, %v869
        %v902 = vsel %vm774, %v742, %v870
        %v903 = vsel %vm775, %v743, %v871
        %v904 = vsel %vm776, %v744, %v872
        %v905 = vsel %vm777, %v745, %v873
        %v906 = vsel %vm778, %v746, %v874
        %v907 = vsel %vm779, %v747, %v875
        %v908 = vsel %vm780, %v748, %v876
        %v909 = vsel %vm781, %v749, %v877
        %v910 = vsel %vm782, %v750, %v878
        %v911 = vsel %vm783, %v751, %v879
        %912 = vst [vmem:[%s257] sm:$0xff] %v880
        %913 = vst [vmem:[%s257 + $0x8] sm:$0xff] %v881
        %914 = vst [vmem:[%s257 + $0x10] sm:$0xff] %v882
        %915 = vst [vmem:[%s257 + $0x18] sm:$0xff] %v883
        %916 = vst [vmem:[%s257 + $0x20] sm:$0xff] %v884
        %917 = vst [vmem:[%s257 + $0x28] sm:$0xff] %v885
        %918 = vst [vmem:[%s257 + $0x30] sm:$0xff] %v886
        %919 = vst [vmem:[%s257 + $0x38] sm:$0xff] %v887
        %920 = vst [vmem:[%s257 + $0x40] sm:$0xff] %v888
        %921 = vst [vmem:[%s257 + $0x48] sm:$0xff] %v889
        %922 = vst [vmem:[%s257 + $0x50] sm:$0xff] %v890
        %923 = vst [vmem:[%s257 + $0x58] sm:$0xff] %v891
        %924 = vst [vmem:[%s257 + $0x60] sm:$0xff] %v892
        %925 = vst [vmem:[%s257 + $0x68] sm:$0xff] %v893
        %926 = vst [vmem:[%s257 + $0x70] sm:$0xff] %v894
        %927 = vst [vmem:[%s257 + $0x78] sm:$0xff] %v895
        %928 = vst [vmem:[%s257 + $0x80] sm:$0xff] %v896
        %929 = vst [vmem:[%s257 + $0x88] sm:$0xff] %v897
        %930 = vst [vmem:[%s257 + $0x90] sm:$0xff] %v898
        %931 = vst [vmem:[%s257 + $0x98] sm:$0xff] %v899
        %932 = vst [vmem:[%s257 + $0xa0] sm:$0xff] %v900
        %933 = vst [vmem:[%s257 + $0xa8] sm:$0xff] %v901
        %934 = vst [vmem:[%s257 + $0xb0] sm:$0xff] %v902
        %935 = vst [vmem:[%s257 + $0xb8] sm:$0xff] %v903
        %936 = vst [vmem:[%s257 + $0xc0] sm:$0xff] %v904
        %937 = vst [vmem:[%s257 + $0xc8] sm:$0xff] %v905
        %938 = vst [vmem:[%s257 + $0xd0] sm:$0xff] %v906
        %939 = vst [vmem:[%s257 + $0xd8] sm:$0xff] %v907
        %940 = vst [vmem:[%s257 + $0xe0] sm:$0xff] %v908
        %941 = vst [vmem:[%s257 + $0xe8] sm:$0xff] %v909
        %942 = vst [vmem:[%s257 + $0xf0] sm:$0xff] %v910
        %943 = vst [vmem:[%s257 + $0xf8] sm:$0xff] %v911
        %s944 = sand.u32 %s141, 1
        %s945 = scalar_lea.sflag [#allocation4], %s944
        %s946 = sand.u32 %s141, 1
        %s947 = smul.addr %s946, 256
        %s948 = scalar_lea.vmem [#allocation7], %s947
        // Predicated region
        $region49: #{tpu_custom_call.1} parent=39 // pred_check
          %p949 = pneg %p151
        $region50: #{tpu_custom_call.1} parent=39 // pred_check_branch
          %951 = sbr.rel (%p949) target = $region52
        $region51: #{tpu_custom_call.1} parent=39 // pred_region
          %s953 = ssub.s32 4096, 4096
          %954 = vsyncadd %s945, %s953
          %s955 = smul.addr %s23, 32
          %s956 = smul.addr %s955, 128
          %s957 = scalar_lea.hbm %s5, %s956
          %s958 = sshll.u32 %s948, 4
          %s959 = int_to_ptr.vmem [resolvable:$true] %s958
          %964 = dma.vmem_to_hbm [thread:$0]  %s959, 4096, %s957, %s945, 128, 128, 8
        $region52: #{tpu_custom_call.1} parent=39 // pred_fallthru
          _
      $region40: #{tpu_custom_call.1} parent=5 // pred_fallthru
        _
      %p965 = scmp.le.s32.totalorder 2, %s18
      // Predicated region
      $region53: #{tpu_custom_call.1} parent=5 // pred_check
        %p966 = pneg %p965
      $region54: #{tpu_custom_call.1} parent=5 // pred_check_branch
        %968 = sbr.rel (%p966) target = $region56
      $region55: #{tpu_custom_call.1} parent=5 // pred_region
        %s969 = ssub.s32 %s18, 2
        // Predicated region
        $region57: #{tpu_custom_call.1} parent=55 // pred_check
          %p970 = pneg %p157
        $region58: #{tpu_custom_call.1} parent=55 // pred_check_branch
          %972 = sbr.rel (%p970) target = $region60
        $region59: #{tpu_custom_call.1} parent=55 // pred_region
          %s973 = sand.u32 %s142, 1
          %s974 = scalar_lea.sflag [#allocation4], %s973
          %s975 = sand.u32 %s142, 1
          %s976 = smul.addr %s975, 256
          %s977 = scalar_lea.vmem [#allocation7], %s976
          %978 = dma.done %s974, 4096
        $region60: #{tpu_custom_call.1} parent=55 // pred_fallthru
          _
      $region56: #{tpu_custom_call.1} parent=5 // pred_fallthru
        _
    $region6: #{tpu_custom_call.1} parent=1 // loop_footer
      %s22 = sadd.s32 1, %s18
    $region7: #{tpu_custom_call.1} parent=1 // loop_footer_branch
      %17 = sbr.rel target = $region3
    $region8: #{tpu_custom_call.1} parent=1 // loop_exit
      _
    %979 = vsyncpa [#allocation3], 1
    %s980 = scalar_lea.sflag [#allocation3], 1
    %981 = vsyncpa %s980, 1
    %982 = vsyncpa [#allocation6], 1
    %983 = vsyncpa [#allocation4], 1
    %s984 = scalar_lea.sflag [#allocation4], 1
    %985 = vsyncpa %s984, 1

</llo_original>
